<compile_context>
chip_gen: v5e
topology: v5e:2x2
jax: 0.10.0
libtpu: 0.0.40
codegen_flags: <defaults>
</compile_context>

<pallas_src>
import functools
import math

import jax
import jax.numpy as jnp
from jax.experimental import pallas as pl
from jax.experimental.pallas import tpu as pltpu


def _round_up(n: int, m: int) -> int:
    return ((n + m - 1) // m) * m


def build_pe_table(d_model: int, max_len: int = 5000) -> jnp.ndarray:
    """Sinusoidal positional encoding table, shape (max_len, d_model)."""
    position = jnp.arange(max_len, dtype=jnp.float32)[:, None]             # (max_len, 1)
    div_term = jnp.exp(
        jnp.arange(0, d_model, 2, dtype=jnp.float32)
        * (-math.log(10000.0) / d_model)
    )                                                                       # (ceil(D/2),)
    angles = position * div_term                                            # (max_len, ceil(D/2))
    pe = jnp.zeros((max_len, d_model), dtype=jnp.float32)
    pe = pe.at[:, 0::2].set(jnp.sin(angles))
    pe = pe.at[:, 1::2].set(jnp.cos(angles)[:, : d_model // 2])             # odd d_model safe
    return pe


def _pe_add_dropout_kernel(seed_ref, x_ref, pe_ref, o_ref, *, p, training, cols_total):
    # x_ref / o_ref block: (tB, tC); pe_ref block: (1, tC) broadcast over rows.
    y = x_ref[...] + pe_ref[...]

    if training and p >= 1.0:
        o_ref[...] = jnp.zeros(o_ref.shape, o_ref.dtype)
        return

    if training and p > 0.0:
        tB, tC = y.shape
        c_blk = pl.program_id(0)
        b_blk = pl.program_id(1)

        # Unique per-element counter, then a stateless 32-bit mix (splitmix/murmur-style
        # finalizer). Pure VPU int ops -> lowers on Mosaic and in interpret mode.
        row = (jax.lax.broadcasted_iota(jnp.int32, (tB, tC), 0)
               + b_blk * tB).astype(jnp.uint32)
        col = (jax.lax.broadcasted_iota(jnp.int32, (tB, tC), 1)
               + c_blk * tC).astype(jnp.uint32)
        h = row * jnp.uint32(cols_total) + col
        h = h ^ (seed_ref[0].astype(jnp.uint32) * jnp.uint32(0x9E3779B9))
        h = (h ^ (h >> 16)) * jnp.uint32(0x7FEB352D)
        h = (h ^ (h >> 15)) * jnp.uint32(0x846CA68B)
        h = h ^ (h >> 16)

        keep_prob = 1.0 - p
        threshold = jnp.uint32(min(int(keep_prob * 4294967296.0), 4294967295))
        keep = h < threshold
        scale = jnp.asarray(1.0 / keep_prob, dtype=y.dtype)
        # TODO(synk): matches nn.Dropout semantics (Bernoulli keep, 1/(1-p) rescale), but
        # cannot reproduce torch's exact RNG stream bit-for-bit.
        y = jnp.where(keep, y * scale, jnp.zeros_like(y))

    o_ref[...] = y.astype(o_ref.dtype)


def positional_encoding_forward(x, pe_table, *, p=0.1, training=True, seed=0):
    """x: (B, S, D). Returns dropout(x + pe[:S] broadcast over batch)."""
    B, S, D = x.shape
    C = S * D

    x2 = x.reshape(B, C)
    pe_flat = pe_table[:S, :].reshape(1, C).astype(x.dtype)

    itemsize = jnp.dtype(x.dtype).itemsize
    # Lane-dense column tile: multiple of 128, capped at 2048 columns.
    tC = min(2048, _round_up(C, 128))
    C_pad = _round_up(C, tC)
    # Row tile targets ~2 MiB per buffer: comfortably inside v7x's 64 MiB VMEM even with
    # double-buffered input + output + pe tile + u32 temporaries.
    target_rows = max(8, (2 * 1024 * 1024) // (tC * itemsize))
    if B <= target_rows:
        tB, B_pad = B, B            # block dim == full array dim (allowed)
    else:
        tB = (target_rows // 8) * 8  # multiple of 8 sublanes
        B_pad = _round_up(B, tB)

    if C_pad != C:
        x2 = jnp.pad(x2, ((0, 0), (0, C_pad - C)))
        pe_flat = jnp.pad(pe_flat, ((0, 0), (0, C_pad - C)))
    if B_pad != B:
        x2 = jnp.pad(x2, ((0, B_pad - B), (0, 0)))

    seed_arr = jnp.array([seed], dtype=jnp.int32)
    kernel = functools.partial(
        _pe_add_dropout_kernel, p=float(p), training=bool(training), cols_total=C_pad
    )

    n_c = C_pad // tC
    n_b = B_pad // tB

    out2 = pl.pallas_call(
        kernel,
        out_shape=jax.ShapeDtypeStruct((B_pad, C_pad), x.dtype),
        grid_spec=pltpu.PrefetchScalarGridSpec(
            num_scalar_prefetch=1,
            # Column tiles OUTER, batch tiles INNER -> pe block index unchanged across
            # consecutive steps, so its DMA is skipped and the table is reused.
            grid=(n_c, n_b),
            in_specs=[
                pl.BlockSpec((tB, tC), lambda c, b, seed: (b, c)),
                pl.BlockSpec((1, tC), lambda c, b, seed: (0, c)),
            ],
            out_specs=pl.BlockSpec((tB, tC), lambda c, b, seed: (b, c)),
        ),
        compiler_params=pltpu.CompilerParams(
            dimension_semantics=("parallel", "parallel"),  # stateless RNG -> order-free
            vmem_limit_bytes=32 * 1024 * 1024,
        ),
    )(seed_arr, x2, pe_flat)

    return out2[:B, :C].reshape(B, S, D)


if __name__ == "__main__":
    # Small shapes consistent with the module: (batch, seq, d_model)
    B, S, D = 2, 8, 32
    key = jax.random.PRNGKey(0)
    x = jax.random.normal(key, (B, S, D), dtype=jnp.float32)

    pe_table = build_pe_table(d_model=D, max_len=5000)

    # Eval mode (deterministic) and train mode (dropout on).
    out_eval = positional_encoding_forward(x, pe_table, p=0.1, training=False)
    out_train = positional_encoding_forward(x, pe_table, p=0.1, training=True, seed=42)

    jax.block_until_ready(out_eval)
    jax.block_until_ready(out_train)

    # Eval path must match plain JAX broadcast-add exactly.
    ref = x + pe_table[:S, :][None, :, :]
    assert out_eval.shape == (B, S, D)
    assert jnp.allclose(out_eval, ref, atol=1e-5), "eval mismatch vs reference"

    # Train path: every non-dropped element must equal ref / keep_prob.
    keep_prob = 1.0 - 0.1
    dropped = out_train == 0.0
    kept_ok = jnp.where(
        dropped, True, jnp.isclose(out_train, ref / keep_prob, rtol=1e-4, atol=1e-5)
    )
    assert bool(jnp.all(kept_ok)), "train-mode kept elements mismatch"

    print("KERNEL_OK")
</pallas_src>

<mosaic_0001>
module attributes {stable_mosaic.version = 11 : i64} {
  func.func @_pe_add_dropout_kernel(%arg0: i32, %arg1: i32, %arg2: memref<1xi32, #tpu.memory_space<smem>>, %arg3: memref<2x256xf32, #tpu.memory_space<vmem>>, %arg4: memref<1x256xf32, #tpu.memory_space<vmem>>, %arg5: memref<2x256xf32, #tpu.memory_space<vmem>>) attributes {dimension_semantics = [#tpu.dimension_semantics<parallel>, #tpu.dimension_semantics<parallel>], iteration_bounds = array<i64: 1, 1>, scalar_prefetch = 1 : i64, scratch_operands = 0 : i64, tpu.core_type = #tpu.core_type<tc>, window_params = [{transform_indices = @transform_0, window_bounds = array<i64: 2, 256>}, {transform_indices = @transform_1, window_bounds = array<i64: 1, 256>}, {transform_indices = @transform_2, window_bounds = array<i64: 2, 256>}]} {
    %c0 = arith.constant 0 : index
    %c0_0 = arith.constant 0 : index
    %0 = vector.load %arg3[%c0, %c0_0] : memref<2x256xf32, #tpu.memory_space<vmem>>, vector<2x256xf32>
    %c0_1 = arith.constant 0 : index
    %c0_2 = arith.constant 0 : index
    %1 = vector.load %arg4[%c0_1, %c0_2] : memref<1x256xf32, #tpu.memory_space<vmem>>, vector<1x256xf32>
    %2 = vector.broadcast %1 : vector<1x256xf32> to vector<2x256xf32>
    %3 = arith.addf %0, %2 : vector<2x256xf32>
    %c0_3 = arith.constant 0 : index
    %c0_4 = arith.constant 0 : index
    %4 = vector.load %arg5[%c0_3, %c0_4] : memref<2x256xf32, #tpu.memory_space<vmem>>, vector<2x256xf32>
    tpu.vector_store %arg5[%c0_3, %c0_4], %3 {strides = array<i32>} : memref<2x256xf32, #tpu.memory_space<vmem>>, vector<2x256xf32>,
    return
  }
  func.func @transform_0(%arg0: i32, %arg1: i32, %arg2: memref<1xi32, #tpu.memory_space<smem>>) -> (i32, i32) {
    %c0_i32 = arith.constant 0 : i32
    return %arg1, %arg0 : i32, i32
  }
  func.func @transform_1(%arg0: i32, %arg1: i32, %arg2: memref<1xi32, #tpu.memory_space<smem>>) -> (i32, i32) {
    %c0_i32 = arith.constant 0 : i32
    %c0_i32_0 = arith.constant 0 : i32
    return %c0_i32, %arg0 : i32, i32
  }
  func.func @transform_2(%arg0: i32, %arg1: i32, %arg2: memref<1xi32, #tpu.memory_space<smem>>) -> (i32, i32) {
    %c0_i32 = arith.constant 0 : i32
    return %arg1, %arg0 : i32, i32
  }
}

</mosaic_0001>

<llo_original>
// kernel: tpu_custom_call.1
$region0: #{tpu_custom_call.1}
  #allocation0 [shape = 'u32[]', space=smem, size = 0x4, offset = 0x4, fixed_abs, tag = 'smem constant byte address 0x4 - core index']
  #allocation1 [shape = 'u32[72,128]{1,0:T(1,128)}', space=vmem, size = 0x9000, scoped, tag = 'internal scratch']
  #allocation2 [shape = 's32[1]{0}', space=sflag, size = 0x4, scoped, tag = 'scoped memory for tpu_custom_call.1']
  #allocation3 [shape = 's32[1]{0:T(128)S(6)}', space=smem, size = 0x200, scoped, tag = 'prefetched SMEM operand 0']
  %s0 = inlined_call_operand.<no memory space> [shape: s32[1], index: 0, kind: input, shape index: {}]
  %s1 = inlined_call_operand.hbm [shape: f32[2,256], index: 1, kind: input, shape index: {}]
  %s2 = inlined_call_operand.vmem [shape: f32[1,256], index: 2, kind: input, shape index: {}]
  %s3 = inlined_call_operand.hbm [shape: f32[2,256], index: 3, kind: output, shape index: {}]
  %s4 = sld [smem:[#allocation0]]
  $region22: #{tpu_custom_call.1} parent=0
    _
  %s6 = ssub.s32 1, %s4
  %s7 = scalar_select 0, %s6, %s4
  %8 = sst [smem:[#allocation3]] %s0
  $region1: #{tpu_custom_call.1} parent=0
    #allocation4 [shape = 'u8[2048]{0}', space=vmem, size = 0x800, scoped, tag = 'input window, operand 1, single buffered']
    #allocation5 [shape = 's32[1]{0}', space=sflag, size = 0x4, scoped, tag = 'scoped memory for tpu_custom_call.1']
    #allocation6 [shape = 's32[1]{0}', space=sflag, size = 0x4, scoped, tag = 'scoped memory for tpu_custom_call.1']
    #allocation7 [shape = 'u8[2048]{0}', space=vmem, size = 0x800, scoped, tag = 'output window, operand 0, single buffered']
    %9 = vsyncpa [#allocation5], 0
    %10 = vsyncpa [#allocation6], 0
    // Predicated region
    $region2: #{tpu_custom_call.1} parent=1 // pred_check
      _
    $region3: #{tpu_custom_call.1} parent=1 // pred_check_branch
      %12 = sbr.rel (0) target = $region5
    $region4: #{tpu_custom_call.1} parent=1 // pred_region
      %14 = vsyncadd [#allocation5], 0
      %s16 = sshll.u32 %s1, 4
      %s17 = int_to_ptr.hbm [resolvable:$true] %s16
      %s18 = sshll.u32 [#allocation4], 4
      %s19 = int_to_ptr.vmem [resolvable:$true] %s18
      %21 = dma.hbm_to_vmem [thread:$0]  %s17, 64, %s19, [#allocation5]
    $region5: #{tpu_custom_call.1} parent=1 // pred_fallthru
      _
    // Predicated region
    $region6: #{tpu_custom_call.1} parent=1 // pred_check
      _
    $region7: #{tpu_custom_call.1} parent=1 // pred_check_branch
      %23 = sbr.rel (0) target = $region9
    $region8: #{tpu_custom_call.1} parent=1 // pred_region
      _
    $region9: #{tpu_custom_call.1} parent=1 // pred_fallthru
      _
    // Predicated region
    $region10: #{tpu_custom_call.1} parent=1 // pred_check
      _
    $region11: #{tpu_custom_call.1} parent=1 // pred_check_branch
      %25 = sbr.rel (0) target = $region13
    $region12: #{tpu_custom_call.1} parent=1 // pred_region
      %27 = dma.done [#allocation5], 64
    $region13: #{tpu_custom_call.1} parent=1 // pred_fallthru
      _
    %v28 = vld [vmem:[#allocation4] sm:$0xf]
    %v29 = vld [vmem:[%s2] sm:$0x3]
    %v31 = vperm.slane %v29, 0
    %v32 = vperm.slane %v29, 1
    %v33 = vrot.slane %v32, 6
    %vm34 = vcmask 1041408
    %v35 = vsel %vm34, %v31, %v33
    %v37 = vadd.f32 %v28, %v35
    %38 = vst [vmem:[#allocation7] sm:$0xf] %v37
    // Predicated region
    $region14: #{tpu_custom_call.1} parent=1 // pred_check
      _
    $region15: #{tpu_custom_call.1} parent=1 // pred_check_branch
      %40 = sbr.rel (0) target = $region17
    $region16: #{tpu_custom_call.1} parent=1 // pred_region
      %42 = vsyncadd [#allocation6], 0
      %s44 = sshll.u32 [#allocation7], 4
      %s45 = int_to_ptr.vmem [resolvable:$true] %s44
      %s46 = sshll.u32 %s3, 4
      %s47 = int_to_ptr.hbm [resolvable:$true] %s46
      %49 = dma.vmem_to_hbm [thread:$0]  %s45, 64, %s47, [#allocation6]
    $region17: #{tpu_custom_call.1} parent=1 // pred_fallthru
      _
    // Predicated region
    $region18: #{tpu_custom_call.1} parent=1 // pred_check
      _
    $region19: #{tpu_custom_call.1} parent=1 // pred_check_branch
      %51 = sbr.rel (0) target = $region21
    $region20: #{tpu_custom_call.1} parent=1 // pred_region
      %53 = dma.done [#allocation6], 64
    $region21: #{tpu_custom_call.1} parent=1 // pred_fallthru
      _
    %54 = vsyncpa [#allocation5], 1
    %55 = vsyncpa [#allocation6], 1

</llo_original>
